<compile_context>
chip_gen: v6e
topology: v6e:2x2x1
jax: 0.10.0
libtpu: 0.0.40
codegen_flags: <defaults>
</compile_context>

<pallas_src>
import random

import numpy as np
import jax
import jax.numpy as jnp
from jax.experimental import pallas as pl
from jax.experimental.pallas import tpu as pltpu

config = {
    'vocab_size': 64,
    'vocab_embed_size': 32,
    'sentence_len': 8,
    'output_size': 32,
    'layers_size': [2, 3, 2],
    'layers_antenna_max_size': [1, 2, 2],
    'layers_antenna_probability_inv': [1, 2, 2],
}


# --------------------------------------------------------------------------
# Fused forward kernel (static plan baked in after the routing graph freezes)
# --------------------------------------------------------------------------
def _make_fused_kernel(plan, proj_off, proj_rows, M, T, E, O, V, with_loss, eps=1e-5):
    """plan[l] = (out_width, blocks); blocks = ((src_layer, row_off, rows), ...) where
    src_layer == -1 means the LayerNorm output, else a previous layer's fused activation."""
    n_layers = len(plan)

    def kernel(ids_ref, emb_ref, w_ref, b_ref, logits_ref, *rest):
        loss_ref = rest[0] if with_loss else None

        # ---- fused token + position embedding gather: one-hot @ [tok_table; pos_table] ----
        tok_id = ids_ref[:, 0:1]                      # (M, 1) int32
        pos_id = ids_ref[:, 1:2]                      # (M, 1) int32, pre-offset by V
        cols = jax.lax.broadcasted_iota(jnp.int32, (M, V + T), 1)
        onehot = jnp.logical_or(cols == tok_id, cols == pos_id).astype(jnp.float32)
        x = jnp.dot(onehot, emb_ref[0:V + T, :], preferred_element_type=jnp.float32)  # (M, E)

        # ---- LayerNorm (f32; portable to v5e) ----
        gamma = emb_ref[V + T:V + T + 1, :]
        beta = emb_ref[V + T + 1:V + T + 2, :]
        mean = jnp.mean(x, axis=-1, keepdims=True)
        var = jnp.mean(jnp.square(x - mean), axis=-1, keepdims=True)
        x = (x - mean) * jax.lax.rsqrt(var + eps) * gamma + beta

        # ---- routed layers: one block matmul per (layer, source-layer) pair ----
        acts = []
        for l, (width, blocks) in enumerate(plan):
            z = None
            for (src, off, rows) in blocks:
                inp = x if src < 0 else acts[src]
                part = jnp.dot(inp, w_ref[off:off + rows, 0:width],
                               preferred_element_type=jnp.float32)
                z = part if z is None else z + part
            z = z + b_ref[l:l + 1, 0:width]
            acts.append(jnp.maximum(z, 0.0))

        # ---- vocab projection (chosen element is selected by the weight's block structure) ----
        logits = jnp.dot(acts[-1], w_ref[proj_off:proj_off + proj_rows, 0:V],
                         preferred_element_type=jnp.float32) + b_ref[n_layers:n_layers + 1, 0:V]
        logits_ref[...] = logits

        # ---- fused cross-entropy (logits never leave VMEM before the loss) ----
        if with_loss:
            tgt = ids_ref[:, 2:3]                     # (M, 1) int32
            m = jnp.max(logits, axis=-1, keepdims=True)
            lse = jnp.log(jnp.sum(jnp.exp(logits - m), axis=-1, keepdims=True)) + m
            logp = logits - lse
            vcols = jax.lax.broadcasted_iota(jnp.int32, (M, V), 1)
            nll = -jnp.sum(jnp.where(vcols == tgt, logp, 0.0), axis=-1, keepdims=True)  # (M, 1)
            loss_ref[0, 0] = jnp.sum(nll) * (1.0 / M)

    return kernel


# --------------------------------------------------------------------------
# Model (routing graph + parameters; forward = one fused pallas_call inside one jit)
# --------------------------------------------------------------------------
class Element:
    # TODO(synk): the torch `Element` class was not provided in the reference source;
    # assumed semantics: concat(inputs, axis=-1) -> Linear(input_size*input_n, output_size)
    # -> ReLU; `sentence_len` unused under this assumption.
    def __init__(self, input_size, input_n, output_size, sentence_len, key):
        self.input_n = input_n
        self.input_size = input_size
        din = input_size * input_n
        k1, k2 = jax.random.split(key)
        bound = 1.0 / (din ** 0.5)
        self.w = jax.random.uniform(k1, (din, output_size), jnp.float32, -bound, bound)
        self.b = jax.random.uniform(k2, (output_size,), jnp.float32, -bound, bound)


class RouteElement:
    def __init__(self, element):
        self.ele = element
        self.antenna = []
        self.output = None
        self.potential = []

    def antenna_ready(self):
        return len(self.antenna) == self.ele.input_n

    def potential_rand_pick(self, layer_n, rng):
        if len(self.potential[layer_n]) == 0:
            return None
        return self.potential[layer_n].pop(rng.randrange(len(self.potential[layer_n])))


class LanModelManual:
    def __init__(self, param_key, rng):
        self.rng = rng
        V = config['vocab_size']
        E = config['vocab_embed_size']
        T = config['sentence_len']
        O = config['output_size']
        keys = jax.random.split(param_key, 5)
        self.token_embedding_table = jax.random.normal(keys[0], (V, E), jnp.float32)
        self.position_embedding_table = jax.random.normal(keys[1], (T, E), jnp.float32)
        self.ln_gamma = jnp.ones((E,), jnp.float32)
        self.ln_beta = jnp.zeros((E,), jnp.float32)
        bound = 1.0 / (O ** 0.5)
        self.proj_w = jax.random.uniform(keys[2], (O, V), jnp.float32, -bound, bound)
        self.proj_b = jax.random.uniform(keys[3], (V,), jnp.float32, -bound, bound)

        self.routed = False
        self._plan = None
        self._fn_cache = {}
        self._w_slabs = {}

        layers_size = config['layers_size']
        amax = config['layers_antenna_max_size']
        self.layer_elements = []
        ekey = keys[4]
        for l_idx, l_size in enumerate(layers_size):
            temp = []
            for _ in range(l_size):
                ekey, sub = jax.random.split(ekey)
                if l_idx == 0:
                    re_ = RouteElement(Element(E, 1, O, T, sub))
                else:
                    re_ = RouteElement(Element(O, self.rng.randint(1, amax[l_idx]), O, T, sub))
                    for ls in layers_size:
                        re_.potential.append(list(range(ls)))
                temp.append(re_)
            self.layer_elements.append(temp)

    # ---- host-side routing (stateful Python RNG; freezes the static graph) ----
    def route(self, _x):
        if self.routed:
            return
        self.routed = True
        for l_idx, re_array in enumerate(self.layer_elements):
            if l_idx != 0:
                for r_ele in re_array:
                    while not r_ele.antenna_ready():
                        for l in range(l_idx):
                            if r_ele.antenna_ready():
                                break
                            if self.rng.randint(1, config['layers_antenna_probability_inv'][l]) == 1:
                                pick_n = r_ele.potential_rand_pick(l, self.rng)
                                if pick_n is not None:
                                    r_ele.antenna.append(self.layer_elements[l][pick_n])

    # ---- freeze: collapse the routed graph into packed slabs + a static kernel plan ----
    def _freeze_plan(self):
        E, O = config['vocab_embed_size'], config['output_size']
        V, T = config['vocab_size'], config['sentence_len']
        layers = self.layer_elements
        L = len(layers)
        n = [len(layer) for layer in layers]
        widths = [O * ni for ni in n]
        Wmax = max(widths + [V])

        loc = {}
        for li, layer in enumerate(layers):
            for q, re_ in enumerate(layer):
                loc[id(re_)] = (li, q)

        # per-layer fused weight blocks (one per source layer, zeros where unconnected)
        layer_block_mats = []
        w0 = np.zeros((E, widths[0]), np.float32)
        for j, re_ in enumerate(layers[0]):
            w0[:, j * O:(j + 1) * O] = np.asarray(re_.ele.w)
        layer_block_mats.append([(-1, w0)])
        for l in range(1, L):
            blocks = {}
            for j, re_ in enumerate(layers[l]):
                w = np.asarray(re_.ele.w)                      # (O * n_antenna, O)
                for a_i, src in enumerate(re_.antenna):
                    p, q = loc[id(src)]
                    if p not in blocks:
                        blocks[p] = np.zeros((O * n[p], widths[l]), np.float32)
                    blocks[p][q * O:(q + 1) * O, j * O:(j + 1) * O] += w[a_i * O:(a_i + 1) * O, :]
            layer_block_mats.append([(p, blocks[p]) for p in sorted(blocks)])

        # pack all weight blocks (column zero-padded to Wmax) into one slab; record offsets
        plan, rows = [], []
        off = 0
        for l in range(L):
            blks = []
            for (p, mat) in layer_block_mats[l]:
                r = mat.shape[0]
                padded = np.zeros((r, Wmax), np.float32)
                padded[:, :widths[l]] = mat
                rows.append(padded)
                blks.append((p, off, r))
                off += r
            plan.append((widths[l], tuple(blks)))
        self._plan = tuple(plan)
        self._proj_off = off
        self._proj_rows = O * n[-1]
        self._Wmax = Wmax
        self._w_base = np.concatenate(rows, axis=0)

        # bias slab: per-layer fused biases + vocab-proj bias (zero padded)
        b_rows = []
        for l in range(L):
            row = np.zeros((Wmax,), np.float32)
            row[:widths[l]] = np.concatenate([np.asarray(re_.ele.b) for re_ in layers[l]])
            b_rows.append(row)
        pb = np.zeros((Wmax,), np.float32)
        pb[:V] = np.asarray(self.proj_b)
        b_rows.append(pb)
        self._b_slab = jnp.asarray(np.stack(b_rows, axis=0))

        # embedding slab: [token table; position table; gamma; beta]
        emb = np.zeros((V + T + 2, E), np.float32)
        emb[0:V] = np.asarray(self.token_embedding_table)
        emb[V:V + T] = np.asarray(self.position_embedding_table)
        emb[V + T] = np.asarray(self.ln_gamma)
        emb[V + T + 1] = np.asarray(self.ln_beta)
        self._emb_slab = jnp.asarray(emb)
        self._w_slabs = {}

    def _w_slab_for(self, chosen_local):
        if chosen_local in self._w_slabs:
            return self._w_slabs[chosen_local]
        O, V = config['output_size'], config['vocab_size']
        proj = np.zeros((self._proj_rows, self._Wmax), np.float32)
        proj[chosen_local * O:(chosen_local + 1) * O, 0:V] = np.asarray(self.proj_w)
        slab = jnp.asarray(np.concatenate([self._w_base, proj], axis=0))
        self._w_slabs[chosen_local] = slab
        return slab

    # ---- cached jitted wrapper: ids packing + one fused pallas_call ----
    def _get_forward_fn(self, B, with_loss):
        key = (B, with_loss)
        if key in self._fn_cache:
            return self._fn_cache[key]
        T, E = config['sentence_len'], config['vocab_embed_size']
        O, V = config['output_size'], config['vocab_size']
        M = B * T
        kernel = _make_fused_kernel(self._plan, self._proj_off, self._proj_rows,
                                    M, T, E, O, V, with_loss)
        vmem = pltpu.MemorySpace.VMEM
        in_specs = [pl.BlockSpec(memory_space=vmem)] * 4
        if with_loss:
            out_shape = (jax.ShapeDtypeStruct((M, V), jnp.float32),
                         jax.ShapeDtypeStruct((1, 1), jnp.float32))
            out_specs = (pl.BlockSpec(memory_space=vmem),
                         pl.BlockSpec(memory_space=pltpu.MemorySpace.SMEM))
        else:
            out_shape = jax.ShapeDtypeStruct((M, V), jnp.float32)
            out_specs = pl.BlockSpec(memory_space=vmem)
        fused = pl.pallas_call(kernel, out_shape=out_shape,
                               in_specs=in_specs, out_specs=out_specs)

        pos_col = V + jnp.tile(jnp.arange(T, dtype=jnp.int32), B)   # (M,), batch-major rows

        if with_loss:
            def fwd(idx, targets, emb_slab, w_slab, b_slab):
                ids = jnp.stack([idx.reshape(-1).astype(jnp.int32), pos_col,
                                 targets.reshape(-1).astype(jnp.int32)], axis=-1)   # (M, 3)
                logits2d, loss = fused(ids, emb_slab, w_slab, b_slab)
                return logits2d, loss[0, 0]
        else:
            zeros_col = jnp.zeros((M,), jnp.int32)
            def fwd(idx, emb_slab, w_slab, b_slab):
                ids = jnp.stack([idx.reshape(-1).astype(jnp.int32), pos_col, zeros_col], axis=-1)
                logits2d = fused(ids, emb_slab, w_slab, b_slab)
                return logits2d.reshape(B, T, V)

        fn = jax.jit(fwd)
        self._fn_cache[key] = fn
        return fn

    # ---- forward: matches the torch module's return conventions ----
    def forward(self, out_n, idx, targets=None):
        B, T = idx.shape
        assert T == config['sentence_len'], "error T!=config['sentence_len']"
        self.route(None)                        # freezes the routing graph (content unused)
        if self._plan is None:
            self._freeze_plan()
        n_last = len(self.layer_elements[-1])
        chosen_local = self.rng.randrange(n_last) if out_n == -1 else out_n
        w_slab = self._w_slab_for(chosen_local)
        with_loss = targets is not None
        fn = self._get_forward_fn(B, with_loss)
        if with_loss:
            logits2d, loss = fn(idx, targets, self._emb_slab, w_slab, self._b_slab)
            return logits2d, loss                # (B*T, V), scalar — matches torch
        logits3d = fn(idx, self._emb_slab, w_slab, self._b_slab)
        return logits3d, None                    # (B, T, V), None — matches torch


# --------------------------------------------------------------------------
# Pure-JAX reference (mirrors the torch forward on the frozen graph) for validation
# --------------------------------------------------------------------------
def reference_forward(model, out_n, idx, targets):
    B, T = idx.shape
    E, V = config['vocab_embed_size'], config['vocab_size']
    hp = jax.lax.Precision.HIGHEST
    tok = jnp.take(model.token_embedding_table, idx.reshape(-1), axis=0).reshape(B, T, E)
    x = tok + model.position_embedding_table[None, :, :]
    mean = jnp.mean(x, axis=-1, keepdims=True)
    var = jnp.mean((x - mean) ** 2, axis=-1, keepdims=True)
    x = (x - mean) / jnp.sqrt(var + 1e-5) * model.ln_gamma + model.ln_beta
    outs = {}
    for li, layer in enumerate(model.layer_elements):
        for re_ in layer:
            inp = x if li == 0 else jnp.concatenate([outs[id(a)] for a in re_.antenna], axis=-1)
            y = jnp.einsum('btk,ko->bto', inp, re_.ele.w, precision=hp) + re_.ele.b
            outs[id(re_)] = jnp.maximum(y, 0.0)
    chosen = model.layer_elements[-1][out_n]
    logits = jnp.einsum('bto,ov->btv', outs[id(chosen)], model.proj_w, precision=hp) + model.proj_b
    if targets is None:
        return logits, None
    lf = logits.reshape(B * T, V)
    t = targets.reshape(B * T)
    m = jnp.max(lf, axis=-1, keepdims=True)
    lse = jnp.log(jnp.sum(jnp.exp(lf - m), axis=-1, keepdims=True)) + m
    logp = lf - lse
    loss = -jnp.mean(jnp.take_along_axis(logp, t[:, None], axis=1))
    return lf, loss


# --------------------------------------------------------------------------
if __name__ == "__main__":
    rng = random.Random(0)                     # deterministic routing graph
    model = LanModelManual(jax.random.PRNGKey(42), rng)

    key = jax.random.PRNGKey(0)
    k1, k2 = jax.random.split(key)
    B, T = 2, config['sentence_len']
    idx = jax.random.randint(k1, (B, T), 0, config['vocab_size'], dtype=jnp.int32)
    targets = jax.random.randint(k2, (B, T), 0, config['vocab_size'], dtype=jnp.int32)

    # training-style path (targets given): logits (B*T, V) + scalar loss
    logits, loss = model.forward(0, idx, targets)
    jax.block_until_ready(logits)
    jax.block_until_ready(loss)
    assert logits.shape == (B * T, config['vocab_size'])
    assert loss.shape == ()
    ref_logits, ref_loss = reference_forward(model, 0, idx, targets)
    np.testing.assert_allclose(np.asarray(logits), np.asarray(ref_logits), rtol=2e-3, atol=2e-3)
    np.testing.assert_allclose(float(loss), float(ref_loss), rtol=2e-3, atol=2e-3)

    # inference path (no targets, different chosen output — same compiled kernel, new proj slab)
    logits3d, no_loss = model.forward(1, idx, None)
    jax.block_until_ready(logits3d)
    assert logits3d.shape == (B, T, config['vocab_size'])
    assert no_loss is None
    ref_logits3d, _ = reference_forward(model, 1, idx, None)
    np.testing.assert_allclose(np.asarray(logits3d), np.asarray(ref_logits3d), rtol=2e-3, atol=2e-3)

    print("KERNEL_OK")
</pallas_src>

<mosaic_0001>
module attributes {stable_mosaic.version = 11 : i64} {
  func.func @kernel(%arg0: memref<16x3xi32, #tpu.memory_space<vmem>>, %arg1: memref<74x32xf32, #tpu.memory_space<vmem>>, %arg2: memref<320x96xf32, #tpu.memory_space<vmem>>, %arg3: memref<4x96xf32, #tpu.memory_space<vmem>>, %arg4: memref<16x64xf32, #tpu.memory_space<vmem>>, %arg5: memref<1x1xf32, #tpu.memory_space<smem>>) attributes {dimension_semantics = [], scalar_prefetch = 0 : i64, scratch_operands = 0 : i64, tpu.core_type = #tpu.core_type<tc>} {
    %c0 = arith.constant 0 : index
    %c0_0 = arith.constant 0 : index
    %0 = vector.load %arg0[%c0, %c0_0] : memref<16x3xi32, #tpu.memory_space<vmem>>, vector<16x1xi32>
    %c0_1 = arith.constant 0 : index
    %c1 = arith.constant 1 : index
    %1 = vector.load %arg0[%c0_1, %c1] : memref<16x3xi32, #tpu.memory_space<vmem>>, vector<16x1xi32>
    %2 = tpu.iota {dimensions = array<i32: 1>} : vector<16x72xi32>
    %3 = vector.broadcast %0 : vector<16x1xi32> to vector<16x72xi32>
    %4 = arith.cmpi eq, %2, %3 : vector<16x72xi32>
    %5 = vector.broadcast %1 : vector<16x1xi32> to vector<16x72xi32>
    %6 = arith.cmpi eq, %2, %5 : vector<16x72xi32>
    %7 = arith.ori %4, %6 : vector<16x72xi1>
    %8 = arith.extui %7 : vector<16x72xi1> to vector<16x72xi32>
    %9 = arith.sitofp %8 : vector<16x72xi32> to vector<16x72xf32>
    %c0_2 = arith.constant 0 : index
    %c0_3 = arith.constant 0 : index
    %10 = vector.load %arg1[%c0_2, %c0_3] : memref<74x32xf32, #tpu.memory_space<vmem>>, vector<72x32xf32>
    %cst = arith.constant dense<0.000000e+00> : vector<16x32xf32>
    %11 = tpu.matmul %9, %10, %cst {dimension_numbers = #tpu.dot_dimension_numbers<[1], [0], [0], [1], [0, 0, 1, 1], [], []>} : vector<16x72xf32>, vector<72x32xf32>, vector<16x32xf32> -> vector<16x32xf32>
    %c72 = arith.constant 72 : index
    %c0_4 = arith.constant 0 : index
    %12 = vector.load %arg1[%c72, %c0_4] : memref<74x32xf32, #tpu.memory_space<vmem>>, vector<1x32xf32>
    %c73 = arith.constant 73 : index
    %c0_5 = arith.constant 0 : index
    %13 = vector.load %arg1[%c73, %c0_5] : memref<74x32xf32, #tpu.memory_space<vmem>>, vector<1x32xf32>
    %cst_6 = arith.constant dense<0.000000e+00> : vector<16xf32>
    %14 = vector.multi_reduction <add>, %11, %cst_6 [1] : vector<16x32xf32> to vector<16xf32>
    %15 = vector.shape_cast %14 : vector<16xf32> to vector<16x1xf32>
    %cst_7 = arith.constant 3.200000e+01 : f32
    %16 = vector.broadcast %cst_7 : f32 to vector<16x1xf32>
    %17 = arith.divf %15, %16 : vector<16x1xf32>
    %18 = vector.broadcast %17 : vector<16x1xf32> to vector<16x32xf32>
    %19 = arith.subf %11, %18 : vector<16x32xf32>
    %20 = arith.mulf %19, %19 : vector<16x32xf32>
    %cst_8 = arith.constant dense<0.000000e+00> : vector<16xf32>
    %21 = vector.multi_reduction <add>, %20, %cst_8 [1] : vector<16x32xf32> to vector<16xf32>
    %22 = vector.shape_cast %21 : vector<16xf32> to vector<16x1xf32>
    %cst_9 = arith.constant 3.200000e+01 : f32
    %23 = vector.broadcast %cst_9 : f32 to vector<16x1xf32>
    %24 = arith.divf %22, %23 : vector<16x1xf32>
    %25 = vector.broadcast %17 : vector<16x1xf32> to vector<16x32xf32>
    %26 = arith.subf %11, %25 : vector<16x32xf32>
    %cst_10 = arith.constant 9.99999974E-6 : f32
    %27 = vector.broadcast %cst_10 : f32 to vector<16x1xf32>
    %28 = arith.addf %24, %27 : vector<16x1xf32>
    %29 = math.rsqrt %28 : vector<16x1xf32>
    %30 = vector.broadcast %29 : vector<16x1xf32> to vector<16x32xf32>
    %31 = arith.mulf %26, %30 : vector<16x32xf32>
    %32 = vector.broadcast %12 : vector<1x32xf32> to vector<16x32xf32>
    %33 = arith.mulf %31, %32 : vector<16x32xf32>
    %34 = vector.broadcast %13 : vector<1x32xf32> to vector<16x32xf32>
    %35 = arith.addf %33, %34 : vector<16x32xf32>
    %c0_11 = arith.constant 0 : index
    %c0_12 = arith.constant 0 : index
    %36 = vector.load %arg2[%c0_11, %c0_12] : memref<320x96xf32, #tpu.memory_space<vmem>>, vector<32x64xf32>
    %cst_13 = arith.constant dense<0.000000e+00> : vector<16x64xf32>
    %37 = tpu.matmul %35, %36, %cst_13 {dimension_numbers = #tpu.dot_dimension_numbers<[1], [0], [0], [1], [0, 0, 1, 1], [], []>} : vector<16x32xf32>, vector<32x64xf32>, vector<16x64xf32> -> vector<16x64xf32>
    %c0_14 = arith.constant 0 : index
    %c0_15 = arith.constant 0 : index
    %38 = vector.load %arg3[%c0_14, %c0_15] : memref<4x96xf32, #tpu.memory_space<vmem>>, vector<1x64xf32>
    %39 = vector.broadcast %38 : vector<1x64xf32> to vector<16x64xf32>
    %40 = arith.addf %37, %39 : vector<16x64xf32>
    %cst_16 = arith.constant 0.000000e+00 : f32
    %41 = vector.broadcast %cst_16 : f32 to vector<16x64xf32>
    %42 = arith.maximumf %40, %41 : vector<16x64xf32>
    %c32 = arith.constant 32 : index
    %c0_17 = arith.constant 0 : index
    %43 = vector.load %arg2[%c32, %c0_17] : memref<320x96xf32, #tpu.memory_space<vmem>>, vector<64x96xf32>
    %cst_18 = arith.constant dense<0.000000e+00> : vector<16x96xf32>
    %44 = tpu.matmul %42, %43, %cst_18 {dimension_numbers = #tpu.dot_dimension_numbers<[1], [0], [0], [1], [0, 0, 1, 1], [], []>} : vector<16x64xf32>, vector<64x96xf32>, vector<16x96xf32> -> vector<16x96xf32>
    %c1_19 = arith.constant 1 : index
    %c0_20 = arith.constant 0 : index
    %45 = vector.load %arg3[%c1_19, %c0_20] : memref<4x96xf32, #tpu.memory_space<vmem>>, vector<1x96xf32>
    %46 = vector.broadcast %45 : vector<1x96xf32> to vector<16x96xf32>
    %47 = arith.addf %44, %46 : vector<16x96xf32>
    %cst_21 = arith.constant 0.000000e+00 : f32
    %48 = vector.broadcast %cst_21 : f32 to vector<16x96xf32>
    %49 = arith.maximumf %47, %48 : vector<16x96xf32>
    %c96 = arith.constant 96 : index
    %c0_22 = arith.constant 0 : index
    %50 = vector.load %arg2[%c96, %c0_22] : memref<320x96xf32, #tpu.memory_space<vmem>>, vector<64x64xf32>
    %cst_23 = arith.constant dense<0.000000e+00> : vector<16x64xf32>
    %51 = tpu.matmul %42, %50, %cst_23 {dimension_numbers = #tpu.dot_dimension_numbers<[1], [0], [0], [1], [0, 0, 1, 1], [], []>} : vector<16x64xf32>, vector<64x64xf32>, vector<16x64xf32> -> vector<16x64xf32>
    %c160 = arith.constant 160 : index
    %c0_24 = arith.constant 0 : index
    %52 = vector.load %arg2[%c160, %c0_24] : memref<320x96xf32, #tpu.memory_space<vmem>>, vector<96x64xf32>
    %cst_25 = arith.constant dense<0.000000e+00> : vector<16x64xf32>
    %53 = tpu.matmul %49, %52, %cst_25 {dimension_numbers = #tpu.dot_dimension_numbers<[1], [0], [0], [1], [0, 0, 1, 1], [], []>} : vector<16x96xf32>, vector<96x64xf32>, vector<16x64xf32> -> vector<16x64xf32>
    %54 = arith.addf %51, %53 : vector<16x64xf32>
    %c2 = arith.constant 2 : index
    %c0_26 = arith.constant 0 : index
    %55 = vector.load %arg3[%c2, %c0_26] : memref<4x96xf32, #tpu.memory_space<vmem>>, vector<1x64xf32>
    %56 = vector.broadcast %55 : vector<1x64xf32> to vector<16x64xf32>
    %57 = arith.addf %54, %56 : vector<16x64xf32>
    %cst_27 = arith.constant 0.000000e+00 : f32
    %58 = vector.broadcast %cst_27 : f32 to vector<16x64xf32>
    %59 = arith.maximumf %57, %58 : vector<16x64xf32>
    %c256 = arith.constant 256 : index
    %c0_28 = arith.constant 0 : index
    %60 = vector.load %arg2[%c256, %c0_28] : memref<320x96xf32, #tpu.memory_space<vmem>>, vector<64x64xf32>
    %cst_29 = arith.constant dense<0.000000e+00> : vector<16x64xf32>
    %61 = tpu.matmul %59, %60, %cst_29 {dimension_numbers = #tpu.dot_dimension_numbers<[1], [0], [0], [1], [0, 0, 1, 1], [], []>} : vector<16x64xf32>, vector<64x64xf32>, vector<16x64xf32> -> vector<16x64xf32>
    %c3 = arith.constant 3 : index
    %c0_30 = arith.constant 0 : index
    %62 = vector.load %arg3[%c3, %c0_30] : memref<4x96xf32, #tpu.memory_space<vmem>>, vector<1x64xf32>
    %63 = vector.broadcast %62 : vector<1x64xf32> to vector<16x64xf32>
    %64 = arith.addf %61, %63 : vector<16x64xf32>
    %c0_31 = arith.constant 0 : index
    %c0_32 = arith.constant 0 : index
    %65 = vector.load %arg4[%c0_31, %c0_32] : memref<16x64xf32, #tpu.memory_space<vmem>>, vector<16x64xf32>
    tpu.vector_store %arg4[%c0_31, %c0_32], %64 {strides = array<i32>} : memref<16x64xf32, #tpu.memory_space<vmem>>, vector<16x64xf32>,
    %c0_33 = arith.constant 0 : index
    %c2_34 = arith.constant 2 : index
    %66 = vector.load %arg0[%c0_33, %c2_34] : memref<16x3xi32, #tpu.memory_space<vmem>>, vector<16x1xi32>
    %cst_35 = arith.constant dense<0xFF800000> : vector<16xf32>
    %67 = vector.multi_reduction <maximumf>, %64, %cst_35 [1] : vector<16x64xf32> to vector<16xf32>
    %68 = vector.shape_cast %67 : vector<16xf32> to vector<16x1xf32>
    %69 = vector.broadcast %68 : vector<16x1xf32> to vector<16x64xf32>
    %70 = arith.subf %64, %69 : vector<16x64xf32>
    %71 = math.exp %70 : vector<16x64xf32>
    %cst_36 = arith.constant dense<0.000000e+00> : vector<16xf32>
    %72 = vector.multi_reduction <add>, %71, %cst_36 [1] : vector<16x64xf32> to vector<16xf32>
    %73 = vector.shape_cast %72 : vector<16xf32> to vector<16x1xf32>
    %74 = math.log %73 : vector<16x1xf32>
    %75 = arith.addf %74, %68 : vector<16x1xf32>
    %76 = vector.broadcast %75 : vector<16x1xf32> to vector<16x64xf32>
    %77 = arith.subf %64, %76 : vector<16x64xf32>
    %78 = tpu.iota {dimensions = array<i32: 1>} : vector<16x64xi32>
    %79 = vector.broadcast %66 : vector<16x1xi32> to vector<16x64xi32>
    %80 = arith.cmpi eq, %78, %79 : vector<16x64xi32>
    %cst_37 = arith.constant 0.000000e+00 : f32
    %81 = vector.broadcast %cst_37 : f32 to vector<16x64xf32>
    %82 = arith.select %80, %77, %81 : vector<16x64xi1>, vector<16x64xf32>
    %cst_38 = arith.constant dense<0.000000e+00> : vector<16xf32>
    %83 = vector.multi_reduction <add>, %82, %cst_38 [1] : vector<16x64xf32> to vector<16xf32>
    %84 = vector.shape_cast %83 : vector<16xf32> to vector<16x1xf32>
    %cst_39 = arith.constant 0.000000e+00 : f32
    %85 = vector.broadcast %cst_39 : f32 to vector<16x1xf32>
    %86 = arith.subf %85, %84 : vector<16x1xf32>
    %87 = vector.shape_cast %86 : vector<16x1xf32> to vector<1x16x1xf32>
    %cst_40 = arith.constant dense<0.000000e+00> : vector<1xf32>
    %88 = vector.multi_reduction <add>, %87, %cst_40 [1, 2] : vector<1x16x1xf32> to vector<1xf32>
    %89 = vector.shape_cast %88 : vector<1xf32> to vector<1x1x1xf32>
    %90 = vector.extract %89[0, 0, 0] : f32 from vector<1x1x1xf32>
    %cst_41 = arith.constant 6.250000e-02 : f32
    %91 = arith.mulf %90, %cst_41 : f32
    %c0_42 = arith.constant 0 : index
    %c0_43 = arith.constant 0 : index
    %92 = memref.load %arg5[%c0_42, %c0_43] : memref<1x1xf32, #tpu.memory_space<smem>>
    memref.store %91, %arg5[%c0_42, %c0_43] : memref<1x1xf32, #tpu.memory_space<smem>>
    return
  }
}

</mosaic_0001>

<llo_original>
// kernel: fwd.1
$region0: #{fwd.1}
  #allocation0 [shape = 'u32[]', space=smem, size = 0x4, offset = 0x4, fixed_abs, tag = 'smem constant byte address 0x4 - core index']
  #allocation1 [shape = 'u32[144,128]{1,0:T(1,128)}', space=vmem, size = 0x12000, scoped, tag = 'internal scratch']
  %s0 = inlined_call_operand.vmem [shape: s32[16,3], index: 0, kind: input, shape index: {}]
  %s1 = inlined_call_operand.vmem [shape: f32[74,32], index: 1, kind: input, shape index: {}]
  %s2 = inlined_call_operand.vmem [shape: f32[320,96], index: 2, kind: input, shape index: {}]
  %s3 = inlined_call_operand.vmem [shape: f32[4,96], index: 3, kind: input, shape index: {}]
  %s4 = inlined_call_operand.hbm [shape: f32[16,64], index: 4, kind: output, shape index: {0}]
  %s5 = inlined_call_operand.hbm [shape: f32[1,1], index: 5, kind: output, shape index: {1}]
  %6 = xla_tuple %s4, %s5
  %s7 = sld [smem:[#allocation0]]
  $region34: #{fwd.1} parent=0
    _
  %s9 = ssub.s32 1, %s7
  %s10 = scalar_select 0, %s9, %s7
  $region1: #{fwd.1} parent=0
    #allocation2 [shape = 'u8[8192]{0}', space=vmem, size = 0x2000, scoped, tag = 'output window, operand 0, single buffered']
    #allocation3 [shape = 's32[1]{0}', space=sflag, size = 0x4, scoped, tag = 'scoped memory for fwd.1']
    #allocation4 [shape = 's32[1]{0}', space=sflag, size = 0x4, scoped, tag = 'scoped memory for fwd.1']
    #allocation5 [shape = 'u8[512]{0}', space=smem, size = 0x200, scoped, tag = 'output window, operand 1, single buffered']
    %11 = vsyncpa [#allocation3], 0
    %12 = vsyncpa [#allocation4], 0
    // Predicated region
    $region2: #{fwd.1} parent=1 // pred_check
      _
    $region3: #{fwd.1} parent=1 // pred_check_branch
      %14 = sbr.rel (0) target = $region5
    $region4: #{fwd.1} parent=1 // pred_region
      _
    $region5: #{fwd.1} parent=1 // pred_fallthru
      _
    // Predicated region
    $region6: #{fwd.1} parent=1 // pred_check
      _
    $region7: #{fwd.1} parent=1 // pred_check_branch
      %16 = sbr.rel (0) target = $region9
    $region8: #{fwd.1} parent=1 // pred_region
      _
    $region9: #{fwd.1} parent=1 // pred_fallthru
      _
    // Predicated region
    $region10: #{fwd.1} parent=1 // pred_check
      _
    $region11: #{fwd.1} parent=1 // pred_check_branch
      %18 = sbr.rel (0) target = $region13
    $region12: #{fwd.1} parent=1 // pred_region
      _
    $region13: #{fwd.1} parent=1 // pred_fallthru
      _
    // Predicated region
    $region14: #{fwd.1} parent=1 // pred_check
      _
    $region15: #{fwd.1} parent=1 // pred_check_branch
      %20 = sbr.rel (0) target = $region17
    $region16: #{fwd.1} parent=1 // pred_region
      _
    $region17: #{fwd.1} parent=1 // pred_fallthru
      _
    %v21 = vld [vmem:[%s0] sm:$0xff]
    %v22 = vld [vmem:[%s0 + $0x8] sm:$0xff]
    %v23 = vlaneseq
    %v24 = vand.u32 %v23, 127
    %25 = vset.pattern.permute.xlu0 0
    %26 = vperm.xlu0 %25, %v21
    %v27 = vpop.permute.xlu0 %26
    %28 = vset.pattern.permute.xlu0 0
    %29 = vperm.xlu0 %28, %v22
    %v30 = vpop.permute.xlu0 %29
    %vm31 = vcmp.eq.s32.totalorder %v24, %v27
    %vm32 = vcmp.eq.s32.totalorder %v24, %v30
    %33 = vset.pattern.permute.xlu0 1
    %34 = vperm.xlu0 %33, %v21
    %v35 = vpop.permute.xlu0 %34
    %36 = vset.pattern.permute.xlu0 1
    %37 = vperm.xlu0 %36, %v22
    %v38 = vpop.permute.xlu0 %37
    %vm39 = vcmp.eq.s32.totalorder %v24, %v35
    %vm40 = vcmp.eq.s32.totalorder %v24, %v38
    %vm41 = vmor %vm31, %vm39
    %vm42 = vmor %vm32, %vm40
    %v43 = vsel %vm41, 1, 0
    %v44 = vsel %vm42, 1, 0
    %v45 = vcvt.s32.f32 %v43
    %v46 = vcvt.s32.f32 %v44
    %v47 = vld [vmem:[%s1] sm:$0xff]
    %v48 = vld [vmem:[%s1 + $0x8] sm:$0xff]
    %v49 = vld [vmem:[%s1 + $0x10] sm:$0xff]
    %v50 = vld [vmem:[%s1 + $0x18] sm:$0xff]
    %v51 = vld [vmem:[%s1 + $0x20] sm:$0xff]
    %v52 = vld [vmem:[%s1 + $0x28] sm:$0xff]
    %v53 = vld [vmem:[%s1 + $0x30] sm:$0xff]
    %v54 = vld [vmem:[%s1 + $0x38] sm:$0xff]
    %v55 = vld [vmem:[%s1 + $0x40] sm:$0xff]
    %vm56 = vcmask 588800
    %v58 = vsel %vm56, %v45, 0
    %v61 = vsel %vm56, %v46, 0
    %63 = vmatprep.subr.mxu0 0.0
    %64 = vmatpush1.msra.mxu0 0.0
    %65 = vmatprep.subr.mxu0 0.0
    %66 = vmatpush1.msra.mxu0 0.0
    %67 = vmatprep.subr.mxu0 0.0
    %68 = vmatpush1.msra.mxu0 0.0
    %69 = vmatprep.subr.mxu0 0.0
    %70 = vmatpush1.msra.mxu0 0.0
    %71 = vmatprep.subr.mxu0 0.0
    %72 = vmatpush1.msra.mxu0 0.0
    %73 = vmatprep.subr.mxu0 0.0
    %74 = vmatpush1.msra.mxu0 0.0
    %75 = vmatprep.subr.mxu0 0.0
    %76 = vmatpush1.msra.mxu0 0.0
    %77 = vmatprep.subr.mxu0 0.0
    %78 = vmatpush1.msra.mxu0 %v55
    %79 = vmatprep.subr.mxu0 0.0
    %80 = vmatpush1.msra.mxu0 %v54
    %81 = vmatprep.subr.mxu0 0.0
    %82 = vmatpush1.msra.mxu0 %v53
    %83 = vmatprep.subr.mxu0 0.0
    %84 = vmatpush1.msra.mxu0 %v52
    %85 = vmatprep.subr.mxu0 0.0
    %86 = vmatpush1.msra.mxu0 %v51
    %87 = vmatprep.subr.mxu0 0.0
    %88 = vmatpush1.msra.mxu0 %v50
    %89 = vmatprep.subr.mxu0 0.0
    %90 = vmatpush1.msra.mxu0 %v49
    %91 = vmatprep.subr.mxu0 0.0
    %92 = vmatpush1.msra.mxu0 %v48
    %93 = vmatprep.subr.mxu0 0.0
    %94 = vmatpush1.msra.mxu0 %v47
    %95 = vmatprep.subr.mxu0 0.0
    %96 = vmatpush2.msra.mxu0 0.0
    %97 = vmatprep.subr.mxu0 0.0
    %98 = vmatpush2.msra.mxu0 0.0
    %99 = vmatprep.subr.mxu0 0.0
    %100 = vmatpush2.msra.mxu0 0.0
    %101 = vmatprep.subr.mxu0 0.0
    %102 = vmatpush2.msra.mxu0 0.0
    %103 = vmatprep.subr.mxu0 0.0
    %104 = vmatpush2.msra.mxu0 0.0
    %105 = vmatprep.subr.mxu0 0.0
    %106 = vmatpush2.msra.mxu0 0.0
    %107 = vmatprep.subr.mxu0 0.0
    %108 = vmatpush2.msra.mxu0 0.0
    %109 = vmatprep.subr.mxu0 0.0
    %110 = vmatpush2.msra.mxu0 0.0
    %111 = vmatprep.subr.mxu0 0.0
    %112 = vmatpush2.msra.mxu0 0.0
    %113 = vmatprep.subr.mxu0 0.0
    %114 = vmatpush2.msra.mxu0 0.0
    %115 = vmatprep.subr.mxu0 0.0
    %116 = vmatpush2.msra.mxu0 0.0
    %117 = vmatprep.subr.mxu0 0.0
    %118 = vmatpush2.msra.mxu0 0.0
    %119 = vmatprep.subr.mxu0 0.0
    %120 = vmatpush2.msra.mxu0 0.0
    %121 = vmatprep.subr.mxu0 0.0
    %122 = vmatpush2.msra.mxu0 0.0
    %123 = vmatprep.subr.mxu0 0.0
    %124 = vmatpush2.msra.mxu0 0.0
    %125 = vmatprep.subr.mxu0 0.0
    %126 = vmatpush2.msra.mxu0 0.0
    %127 = vmatprep.mubr.f32.mxu0 0.0
    %128 = vmatmul.mubr.f32.gmra.mxu0 %v58
    %v129 = vpop.f32.mrf.mxu0
    %v130 = vadd.f32 0.0, %v129
    %v131 = vpop.f32.mrf.mxu0
    %132 = vmatprep.mubr.f32.mxu0 0.0
    %133 = vmatmul.mubr.f32.gmra.mxu0 %v61
    %v134 = vpop.f32.mrf.mxu0
    %v135 = vadd.f32 0.0, %v134
    %v136 = vpop.f32.mrf.mxu0
    %137 = vdwg.mxu0
    %v138 = vld [vmem:[%s1 + $0x48] sm:$0x1]
    %v139 = vld [vmem:[%s1 + $0x49] sm:$0x1]
    %vm140 = vcmask 261120
    %v141 = vsel %vm140, %v130, 0.0
    %142 = vadd.xlane.f32.xlu0 %v141
    %v143 = vpop.xlane.xlu0 %142
    %v144 = vsel %vm140, %v135, 0.0
    %145 = vadd.xlane.f32.xlu0 %v144
    %v146 = vpop.xlane.xlu0 %145
    %v147 = vrcp.pop 32.0
    %v148 = vmul.f32 %v143, %v147
    %v149 = vmul.f32 %v146, %v147
    %v150 = vsub.f32 %v130, %v148
    %v151 = vsub.f32 %v135, %v149
    %v152 = vmul.f32 %v150, %v150
    %v153 = vmul.f32 %v151, %v151
    %v154 = vsel %vm140, %v152, 0.0
    %155 = vadd.xlane.f32.xlu0 %v154
    %v156 = vpop.xlane.xlu0 %155
    %v157 = vsel %vm140, %v153, 0.0
    %158 = vadd.xlane.f32.xlu0 %v157
    %v159 = vpop.xlane.xlu0 %158
    %v160 = vmul.f32 %v156, %v147
    %v161 = vmul.f32 %v159, %v147
    %v162 = vadd.f32 %v160, 1e-05
    %v163 = vadd.f32 %v161, 1e-05
    %v164 = vrsqrt.pop %v162
    %v165 = vrsqrt.pop %v163
    %v166 = vmul.f32 %v150, %v164
    %v167 = vmul.f32 %v151, %v165
    %v168 = vlaneseq
    %v169 = vshrl.u32 %v168, 7
    %v170 = vsub.s32 0, %v169
    %v171 = vrot.slane %v138, %v170
    %v172 = vmul.f32 %v166, %v171
    %v173 = vmul.f32 %v167, %v171
    %v174 = vlaneseq
    %v175 = vshrl.u32 %v174, 7
    %v176 = vsub.s32 0, %v175
    %v177 = vrot.slane %v139, %v176
    %v178 = vadd.f32 %v172, %v177
    %v179 = vadd.f32 %v173, %v177
    %v180 = vld [vmem:[%s2] sm:$0xff]
    %v181 = vld [vmem:[%s2 + $0x8] sm:$0xff]
    %v182 = vld [vmem:[%s2 + $0x10] sm:$0xff]
    %v183 = vld [vmem:[%s2 + $0x18] sm:$0xff]
    %v184 = vld [vmem:[%s3] sm:$0x1]
    %v185 = vlaneseq
    %v186 = vshrl.u32 %v185, 7
    %v187 = vsub.s32 0, %v186
    %v188 = vrot.slane %v184, %v187
    %v190 = vsel %vm140, %v178, 0
    %v193 = vsel %vm140, %v179, 0
    %195 = vmatprep.subr.mxu0 0.0
    %196 = vmatpush1.msra.mxu0 0.0
    %197 = vmatprep.subr.mxu0 0.0
    %198 = vmatpush1.msra.mxu0 0.0
    %199 = vmatprep.subr.mxu0 0.0
    %200 = vmatpush1.msra.mxu0 0.0
    %201 = vmatprep.subr.mxu0 0.0
    %202 = vmatpush1.msra.mxu0 0.0
    %203 = vmatprep.subr.mxu0 0.0
    %204 = vmatpush1.msra.mxu0 0.0
    %205 = vmatprep.subr.mxu0 0.0
    %206 = vmatpush1.msra.mxu0 0.0
    %207 = vmatprep.subr.mxu0 0.0
    %208 = vmatpush1.msra.mxu0 0.0
    %209 = vmatprep.subr.mxu0 0.0
    %210 = vmatpush1.msra.mxu0 0.0
    %211 = vmatprep.subr.mxu0 0.0
    %212 = vmatpush1.msra.mxu0 0.0
    %213 = vmatprep.subr.mxu0 0.0
    %214 = vmatpush1.msra.mxu0 0.0
    %215 = vmatprep.subr.mxu0 0.0
    %216 = vmatpush1.msra.mxu0 0.0
    %217 = vmatprep.subr.mxu0 0.0
    %218 = vmatpush1.msra.mxu0 0.0
    %219 = vmatprep.subr.mxu0 0.0
    %220 = vmatpush1.msra.mxu0 %v183
    %221 = vmatprep.subr.mxu0 0.0
    %222 = vmatpush1.msra.mxu0 %v182
    %223 = vmatprep.subr.mxu0 0.0
    %224 = vmatpush1.msra.mxu0 %v181
    %225 = vmatprep.subr.mxu0 0.0
    %226 = vmatpush1.msra.mxu0 %v180
    %227 = vmatprep.subr.mxu0 0.0
    %228 = vmatpush2.msra.mxu0 0.0
    %229 = vmatprep.subr.mxu0 0.0
    %230 = vmatpush2.msra.mxu0 0.0
    %231 = vmatprep.subr.mxu0 0.0
    %232 = vmatpush2.msra.mxu0 0.0
    %233 = vmatprep.subr.mxu0 0.0
    %234 = vmatpush2.msra.mxu0 0.0
    %235 = vmatprep.subr.mxu0 0.0
    %236 = vmatpush2.msra.mxu0 0.0
    %237 = vmatprep.subr.mxu0 0.0
    %238 = vmatpush2.msra.mxu0 0.0
    %239 = vmatprep.subr.mxu0 0.0
    %240 = vmatpush2.msra.mxu0 0.0
    %241 = vmatprep.subr.mxu0 0.0
    %242 = vmatpush2.msra.mxu0 0.0
    %243 = vmatprep.subr.mxu0 0.0
    %244 = vmatpush2.msra.mxu0 0.0
    %245 = vmatprep.subr.mxu0 0.0
    %246 = vmatpush2.msra.mxu0 0.0
    %247 = vmatprep.subr.mxu0 0.0
    %248 = vmatpush2.msra.mxu0 0.0
    %249 = vmatprep.subr.mxu0 0.0
    %250 = vmatpush2.msra.mxu0 0.0
    %251 = vmatprep.subr.mxu0 0.0
    %252 = vmatpush2.msra.mxu0 0.0
    %253 = vmatprep.subr.mxu0 0.0
    %254 = vmatpush2.msra.mxu0 0.0
    %255 = vmatprep.subr.mxu0 0.0
    %256 = vmatpush2.msra.mxu0 0.0
    %257 = vmatprep.subr.mxu0 0.0
    %258 = vmatpush2.msra.mxu0 0.0
    %259 = vmatprep.mubr.f32.mxu0 0.0
    %260 = vmatmul.mubr.f32.gmra.mxu0 %v190
    %v261 = vpop.f32.mrf.mxu0
    %v262 = vadd.f32 %v188, %v261
    %v263 = vpop.f32.mrf.mxu0
    %264 = vmatprep.mubr.f32.mxu0 0.0
    %265 = vmatmul.mubr.f32.gmra.mxu0 %v193
    %v266 = vpop.f32.mrf.mxu0
    %v267 = vadd.f32 %v188, %v266
    %v268 = vpop.f32.mrf.mxu0
    %269 = vdwg.mxu0
    %v270 = vmax.f32 %v262, 0.0
    %v271 = vmax.f32 %v267, 0.0
    %v272 = vld [vmem:[%s2 + $0x20] sm:$0xff]
    %v273 = vld [vmem:[%s2 + $0x28] sm:$0xff]
    %v274 = vld [vmem:[%s2 + $0x30] sm:$0xff]
    %v275 = vld [vmem:[%s2 + $0x38] sm:$0xff]
    %v276 = vld [vmem:[%s2 + $0x40] sm:$0xff]
    %v277 = vld [vmem:[%s2 + $0x48] sm:$0xff]
    %v278 = vld [vmem:[%s2 + $0x50] sm:$0xff]
    %v279 = vld [vmem:[%s2 + $0x58] sm:$0xff]
    %v280 = vld [vmem:[%s3 + $0x1] sm:$0x1]
    %v281 = vlaneseq
    %v282 = vshrl.u32 %v281, 7
    %v283 = vsub.s32 0, %v282
    %v284 = vrot.slane %v280, %v283
    %vm285 = vcmask 523264
    %v287 = vsel %vm285, %v270, 0
    %v290 = vsel %vm285, %v271, 0
    %292 = vmatprep.subr.mxu0 0.0
    %293 = vmatpush1.msra.mxu0 0.0
    %294 = vmatprep.subr.mxu0 0.0
    %295 = vmatpush1.msra.mxu0 0.0
    %296 = vmatprep.subr.mxu0 0.0
    %297 = vmatpush1.msra.mxu0 0.0
    %298 = vmatprep.subr.mxu0 0.0
    %299 = vmatpush1.msra.mxu0 0.0
    %300 = vmatprep.subr.mxu0 0.0
    %301 = vmatpush1.msra.mxu0 0.0
    %302 = vmatprep.subr.mxu0 0.0
    %303 = vmatpush1.msra.mxu0 0.0
    %304 = vmatprep.subr.mxu0 0.0
    %305 = vmatpush1.msra.mxu0 0.0
    %306 = vmatprep.subr.mxu0 0.0
    %307 = vmatpush1.msra.mxu0 0.0
    %308 = vmatprep.subr.mxu0 0.0
    %309 = vmatpush1.msra.mxu0 %v279
    %310 = vmatprep.subr.mxu0 0.0
    %311 = vmatpush1.msra.mxu0 %v278
    %312 = vmatprep.subr.mxu0 0.0
    %313 = vmatpush1.msra.mxu0 %v277
    %314 = vmatprep.subr.mxu0 0.0
    %315 = vmatpush1.msra.mxu0 %v276
    %316 = vmatprep.subr.mxu0 0.0
    %317 = vmatpush1.msra.mxu0 %v275
    %318 = vmatprep.subr.mxu0 0.0
    %319 = vmatpush1.msra.mxu0 %v274
    %320 = vmatprep.subr.mxu0 0.0
    %321 = vmatpush1.msra.mxu0 %v273
    %322 = vmatprep.subr.mxu0 0.0
    %323 = vmatpush1.msra.mxu0 %v272
    %324 = vmatprep.subr.mxu0 0.0
    %325 = vmatpush2.msra.mxu0 0.0
    %326 = vmatprep.subr.mxu0 0.0
    %327 = vmatpush2.msra.mxu0 0.0
    %328 = vmatprep.subr.mxu0 0.0
    %329 = vmatpush2.msra.mxu0 0.0
    %330 = vmatprep.subr.mxu0 0.0
    %331 = vmatpush2.msra.mxu0 0.0
    %332 = vmatprep.subr.mxu0 0.0
    %333 = vmatpush2.msra.mxu0 0.0
    %334 = vmatprep.subr.mxu0 0.0
    %335 = vmatpush2.msra.mxu0 0.0
    %336 = vmatprep.subr.mxu0 0.0
    %337 = vmatpush2.msra.mxu0 0.0
    %338 = vmatprep.subr.mxu0 0.0
    %339 = vmatpush2.msra.mxu0 0.0
    %340 = vmatprep.subr.mxu0 0.0
    %341 = vmatpush2.msra.mxu0 0.0
    %342 = vmatprep.subr.mxu0 0.0
    %343 = vmatpush2.msra.mxu0 0.0
    %344 = vmatprep.subr.mxu0 0.0
    %345 = vmatpush2.msra.mxu0 0.0
    %346 = vmatprep.subr.mxu0 0.0
    %347 = vmatpush2.msra.mxu0 0.0
    %348 = vmatprep.subr.mxu0 0.0
    %349 = vmatpush2.msra.mxu0 0.0
    %350 = vmatprep.subr.mxu0 0.0
    %351 = vmatpush2.msra.mxu0 0.0
    %352 = vmatprep.subr.mxu0 0.0
    %353 = vmatpush2.msra.mxu0 0.0
    %354 = vmatprep.subr.mxu0 0.0
    %355 = vmatpush2.msra.mxu0 0.0
    %356 = vmatprep.mubr.f32.mxu0 0.0
    %357 = vmatmul.mubr.f32.gmra.mxu0 %v287
    %v358 = vpop.f32.mrf.mxu0
    %v359 = vadd.f32 %v284, %v358
    %v360 = vpop.f32.mrf.mxu0
    %361 = vmatprep.mubr.f32.mxu0 0.0
    %362 = vmatmul.mubr.f32.gmra.mxu0 %v290
    %v363 = vpop.f32.mrf.mxu0
    %v364 = vadd.f32 %v284, %v363
    %v365 = vpop.f32.mrf.mxu0
    %366 = vdwg.mxu0
    %v367 = vmax.f32 %v359, 0.0
    %v368 = vmax.f32 %v364, 0.0
    %v369 = vld [vmem:[%s2 + $0x60] sm:$0xff]
    %v370 = vld [vmem:[%s2 + $0x68] sm:$0xff]
    %v371 = vld [vmem:[%s2 + $0x70] sm:$0xff]
    %v372 = vld [vmem:[%s2 + $0x78] sm:$0xff]
    %v373 = vld [vmem:[%s2 + $0x80] sm:$0xff]
    %v374 = vld [vmem:[%s2 + $0x88] sm:$0xff]
    %v375 = vld [vmem:[%s2 + $0x90] sm:$0xff]
    %v376 = vld [vmem:[%s2 + $0x98] sm:$0xff]
    %v377 = vld [vmem:[%s2 + $0xa0] sm:$0xff]
    %v378 = vld [vmem:[%s2 + $0xa8] sm:$0xff]
    %v379 = vld [vmem:[%s2 + $0xb0] sm:$0xff]
    %v380 = vld [vmem:[%s2 + $0xb8] sm:$0xff]
    %v381 = vld [vmem:[%s2 + $0xc0] sm:$0xff]
    %v382 = vld [vmem:[%s2 + $0xc8] sm:$0xff]
    %v383 = vld [vmem:[%s2 + $0xd0] sm:$0xff]
    %v384 = vld [vmem:[%s2 + $0xd8] sm:$0xff]
    %v385 = vld [vmem:[%s2 + $0xe0] sm:$0xff]
    %v386 = vld [vmem:[%s2 + $0xe8] sm:$0xff]
    %v387 = vld [vmem:[%s2 + $0xf0] sm:$0xff]
    %v388 = vld [vmem:[%s2 + $0xf8] sm:$0xff]
    %vm389 = vcmask 785408
    %v391 = vsel %vm389, %v367, 0
    %v394 = vsel %vm389, %v368, 0
    %396 = vmatprep.subr.mxu0 0.0
    %397 = vmatpush1.msra.mxu0 0.0
    %398 = vmatprep.subr.mxu0 0.0
    %399 = vmatpush1.msra.mxu0 0.0
    %400 = vmatprep.subr.mxu0 0.0
    %401 = vmatpush1.msra.mxu0 0.0
    %402 = vmatprep.subr.mxu0 0.0
    %403 = vmatpush1.msra.mxu0 0.0
    %404 = vmatprep.subr.mxu0 0.0
    %405 = vmatpush1.msra.mxu0 %v388
    %406 = vmatprep.subr.mxu0 0.0
    %407 = vmatpush1.msra.mxu0 %v387
    %408 = vmatprep.subr.mxu0 0.0
    %409 = vmatpush1.msra.mxu0 %v386
    %410 = vmatprep.subr.mxu0 0.0
    %411 = vmatpush1.msra.mxu0 %v385
    %412 = vmatprep.subr.mxu0 0.0
    %413 = vmatpush1.msra.mxu0 %v384
    %414 = vmatprep.subr.mxu0 0.0
    %415 = vmatpush1.msra.mxu0 %v383
    %416 = vmatprep.subr.mxu0 0.0
    %417 = vmatpush1.msra.mxu0 %v382
    %418 = vmatprep.subr.mxu0 0.0
    %419 = vmatpush1.msra.mxu0 %v381
    %420 = vmatprep.subr.mxu0 0.0
    %421 = vmatpush1.msra.mxu0 %v380
    %422 = vmatprep.subr.mxu0 0.0
    %423 = vmatpush1.msra.mxu0 %v379
    %424 = vmatprep.subr.mxu0 0.0
    %425 = vmatpush1.msra.mxu0 %v378
    %426 = vmatprep.subr.mxu0 0.0
    %427 = vmatpush1.msra.mxu0 %v377
    %428 = vmatprep.subr.mxu0 0.0
    %429 = vmatpush2.msra.mxu0 0.0
    %430 = vmatprep.subr.mxu0 0.0
    %431 = vmatpush2.msra.mxu0 0.0
    %432 = vmatprep.subr.mxu0 0.0
    %433 = vmatpush2.msra.mxu0 0.0
    %434 = vmatprep.subr.mxu0 0.0
    %435 = vmatpush2.msra.mxu0 0.0
    %436 = vmatprep.subr.mxu0 0.0
    %437 = vmatpush2.msra.mxu0 0.0
    %438 = vmatprep.subr.mxu0 0.0
    %439 = vmatpush2.msra.mxu0 0.0
    %440 = vmatprep.subr.mxu0 0.0
    %441 = vmatpush2.msra.mxu0 0.0
    %442 = vmatprep.subr.mxu0 0.0
    %443 = vmatpush2.msra.mxu0 0.0
    %444 = vmatprep.subr.mxu0 0.0
    %445 = vmatpush2.msra.mxu0 0.0
    %446 = vmatprep.subr.mxu0 0.0
    %447 = vmatpush2.msra.mxu0 0.0
    %448 = vmatprep.subr.mxu0 0.0
    %449 = vmatpush2.msra.mxu0 0.0
    %450 = vmatprep.subr.mxu0 0.0
    %451 = vmatpush2.msra.mxu0 0.0
    %452 = vmatprep.subr.mxu0 0.0
    %453 = vmatpush2.msra.mxu0 0.0
    %454 = vmatprep.subr.mxu0 0.0
    %455 = vmatpush2.msra.mxu0 0.0
    %456 = vmatprep.subr.mxu0 0.0
    %457 = vmatpush2.msra.mxu0 0.0
    %458 = vmatprep.subr.mxu0 0.0
    %459 = vmatpush2.msra.mxu0 0.0
    %460 = vmatprep.mubr.f32.mxu0 0.0
    %461 = vmatmul.mubr.f32.gmra.mxu0 %v391
    %v462 = vpop.f32.mrf.mxu0
    %v463 = vadd.f32 0.0, %v462
    %v464 = vpop.f32.mrf.mxu0
    %465 = vmatprep.mubr.f32.mxu0 0.0
    %466 = vmatmul.mubr.f32.gmra.mxu0 %v394
    %v467 = vpop.f32.mrf.mxu0
    %v468 = vadd.f32 0.0, %v467
    %v469 = vpop.f32.mrf.mxu0
    %470 = vdwg.mxu0
    %471 = vmatprep.subr.mxu0 0.0
    %472 = vmatpush1.msra.mxu0 0.0
    %473 = vmatprep.subr.mxu0 0.0
    %474 = vmatpush1.msra.mxu0 0.0
    %475 = vmatprep.subr.mxu0 0.0
    %476 = vmatpush1.msra.mxu0 0.0
    %477 = vmatprep.subr.mxu0 0.0
    %478 = vmatpush1.msra.mxu0 0.0
    %479 = vmatprep.subr.mxu0 0.0
    %480 = vmatpush1.msra.mxu0 0.0
    %481 = vmatprep.subr.mxu0 0.0
    %482 = vmatpush1.msra.mxu0 0.0
    %483 = vmatprep.subr.mxu0 0.0
    %484 = vmatpush1.msra.mxu0 0.0
    %485 = vmatprep.subr.mxu0 0.0
    %486 = vmatpush1.msra.mxu0 0.0
    %487 = vmatprep.subr.mxu0 0.0
    %488 = vmatpush1.msra.mxu0 %v376
    %489 = vmatprep.subr.mxu0 0.0
    %490 = vmatpush1.msra.mxu0 %v375
    %491 = vmatprep.subr.mxu0 0.0
    %492 = vmatpush1.msra.mxu0 %v374
    %493 = vmatprep.subr.mxu0 0.0
    %494 = vmatpush1.msra.mxu0 %v373
    %495 = vmatprep.subr.mxu0 0.0
    %496 = vmatpush1.msra.mxu0 %v372
    %497 = vmatprep.subr.mxu0 0.0
    %498 = vmatpush1.msra.mxu0 %v371
    %499 = vmatprep.subr.mxu0 0.0
    %500 = vmatpush1.msra.mxu0 %v370
    %501 = vmatprep.subr.mxu0 0.0
    %502 = vmatpush1.msra.mxu0 %v369
    %503 = vmatprep.subr.mxu0 0.0
    %504 = vmatpush2.msra.mxu0 0.0
    %505 = vmatprep.subr.mxu0 0.0
    %506 = vmatpush2.msra.mxu0 0.0
    %507 = vmatprep.subr.mxu0 0.0
    %508 = vmatpush2.msra.mxu0 0.0
    %509 = vmatprep.subr.mxu0 0.0
    %510 = vmatpush2.msra.mxu0 0.0
    %511 = vmatprep.subr.mxu0 0.0
    %512 = vmatpush2.msra.mxu0 0.0
    %513 = vmatprep.subr.mxu0 0.0
    %514 = vmatpush2.msra.mxu0 0.0
    %515 = vmatprep.subr.mxu0 0.0
    %516 = vmatpush2.msra.mxu0 0.0
    %517 = vmatprep.subr.mxu0 0.0
    %518 = vmatpush2.msra.mxu0 0.0
    %519 = vmatprep.subr.mxu0 0.0
    %520 = vmatpush2.msra.mxu0 0.0
    %521 = vmatprep.subr.mxu0 0.0
    %522 = vmatpush2.msra.mxu0 0.0
    %523 = vmatprep.subr.mxu0 0.0
    %524 = vmatpush2.msra.mxu0 0.0
    %525 = vmatprep.subr.mxu0 0.0
    %526 = vmatpush2.msra.mxu0 0.0
    %527 = vmatprep.subr.mxu0 0.0
    %528 = vmatpush2.msra.mxu0 0.0
    %529 = vmatprep.subr.mxu0 0.0
    %530 = vmatpush2.msra.mxu0 0.0
    %531 = vmatprep.subr.mxu0 0.0
    %532 = vmatpush2.msra.mxu0 0.0
    %533 = vmatprep.subr.mxu0 0.0
    %534 = vmatpush2.msra.mxu0 0.0
    %535 = vmatprep.mubr.f32.mxu0 0.0
    %536 = vmatmul.mubr.f32.gmra.mxu0 %v287
    %v537 = vpop.f32.mrf.mxu0
    %v538 = vadd.f32 %v463, %v537
    %v539 = vpop.f32.mrf.mxu0
    %540 = vmatprep.mubr.f32.mxu0 0.0
    %541 = vmatmul.mubr.f32.gmra.mxu0 %v290
    %v542 = vpop.f32.mrf.mxu0
    %v543 = vadd.f32 %v468, %v542
    %v544 = vpop.f32.mrf.mxu0
    %545 = vdwg.mxu0
    %v546 = vld [vmem:[%s3 + $0x2] sm:$0x1]
    %v547 = vlaneseq
    %v548 = vshrl.u32 %v547, 7
    %v549 = vsub.s32 0, %v548
    %v550 = vrot.slane %v546, %v549
    %v551 = vadd.f32 %v538, %v550
    %v552 = vadd.f32 %v543, %v550
    %v553 = vmax.f32 %v551, 0.0
    %v554 = vmax.f32 %v552, 0.0
    %v555 = vld [vmem:[%s2 + $0x100] sm:$0xff]
    %v556 = vld [vmem:[%s2 + $0x108] sm:$0xff]
    %v557 = vld [vmem:[%s2 + $0x110] sm:$0xff]
    %v558 = vld [vmem:[%s2 + $0x118] sm:$0xff]
    %v559 = vld [vmem:[%s2 + $0x120] sm:$0xff]
    %v560 = vld [vmem:[%s2 + $0x128] sm:$0xff]
    %v561 = vld [vmem:[%s2 + $0x130] sm:$0xff]
    %v562 = vld [vmem:[%s2 + $0x138] sm:$0xff]
    %v563 = vld [vmem:[%s3 + $0x3] sm:$0x1]
    %v564 = vlaneseq
    %v565 = vshrl.u32 %v564, 7
    %v566 = vsub.s32 0, %v565
    %v567 = vrot.slane %v563, %v566
    %v569 = vsel %vm285, %v553, 0
    %v572 = vsel %vm285, %v554, 0
    %574 = vmatprep.subr.mxu0 0.0
    %575 = vmatpush1.msra.mxu0 0.0
    %576 = vmatprep.subr.mxu0 0.0
    %577 = vmatpush1.msra.mxu0 0.0
    %578 = vmatprep.subr.mxu0 0.0
    %579 = vmatpush1.msra.mxu0 0.0
    %580 = vmatprep.subr.mxu0 0.0
    %581 = vmatpush1.msra.mxu0 0.0
    %582 = vmatprep.subr.mxu0 0.0
    %583 = vmatpush1.msra.mxu0 0.0
    %584 = vmatprep.subr.mxu0 0.0
    %585 = vmatpush1.msra.mxu0 0.0
    %586 = vmatprep.subr.mxu0 0.0
    %587 = vmatpush1.msra.mxu0 0.0
    %588 = vmatprep.subr.mxu0 0.0
    %589 = vmatpush1.msra.mxu0 0.0
    %590 = vmatprep.subr.mxu0 0.0
    %591 = vmatpush1.msra.mxu0 %v562
    %592 = vmatprep.subr.mxu0 0.0
    %593 = vmatpush1.msra.mxu0 %v561
    %594 = vmatprep.subr.mxu0 0.0
    %595 = vmatpush1.msra.mxu0 %v560
    %596 = vmatprep.subr.mxu0 0.0
    %597 = vmatpush1.msra.mxu0 %v559
    %598 = vmatprep.subr.mxu0 0.0
    %599 = vmatpush1.msra.mxu0 %v558
    %600 = vmatprep.subr.mxu0 0.0
    %601 = vmatpush1.msra.mxu0 %v557
    %602 = vmatprep.subr.mxu0 0.0
    %603 = vmatpush1.msra.mxu0 %v556
    %604 = vmatprep.subr.mxu0 0.0
    %605 = vmatpush1.msra.mxu0 %v555
    %606 = vmatprep.subr.mxu0 0.0
    %607 = vmatpush2.msra.mxu0 0.0
    %608 = vmatprep.subr.mxu0 0.0
    %609 = vmatpush2.msra.mxu0 0.0
    %610 = vmatprep.subr.mxu0 0.0
    %611 = vmatpush2.msra.mxu0 0.0
    %612 = vmatprep.subr.mxu0 0.0
    %613 = vmatpush2.msra.mxu0 0.0
    %614 = vmatprep.subr.mxu0 0.0
    %615 = vmatpush2.msra.mxu0 0.0
    %616 = vmatprep.subr.mxu0 0.0
    %617 = vmatpush2.msra.mxu0 0.0
    %618 = vmatprep.subr.mxu0 0.0
    %619 = vmatpush2.msra.mxu0 0.0
    %620 = vmatprep.subr.mxu0 0.0
    %621 = vmatpush2.msra.mxu0 0.0
    %622 = vmatprep.subr.mxu0 0.0
    %623 = vmatpush2.msra.mxu0 0.0
    %624 = vmatprep.subr.mxu0 0.0
    %625 = vmatpush2.msra.mxu0 0.0
    %626 = vmatprep.subr.mxu0 0.0
    %627 = vmatpush2.msra.mxu0 0.0
    %628 = vmatprep.subr.mxu0 0.0
    %629 = vmatpush2.msra.mxu0 0.0
    %630 = vmatprep.subr.mxu0 0.0
    %631 = vmatpush2.msra.mxu0 0.0
    %632 = vmatprep.subr.mxu0 0.0
    %633 = vmatpush2.msra.mxu0 0.0
    %634 = vmatprep.subr.mxu0 0.0
    %635 = vmatpush2.msra.mxu0 0.0
    %636 = vmatprep.subr.mxu0 0.0
    %637 = vmatpush2.msra.mxu0 0.0
    %638 = vmatprep.mubr.f32.mxu0 0.0
    %639 = vmatmul.mubr.f32.gmra.mxu0 %v569
    %v640 = vpop.f32.mrf.mxu0
    %v641 = vadd.f32 %v567, %v640
    %v642 = vpop.f32.mrf.mxu0
    %643 = vmatprep.mubr.f32.mxu0 0.0
    %644 = vmatmul.mubr.f32.gmra.mxu0 %v572
    %v645 = vpop.f32.mrf.mxu0
    %v646 = vadd.f32 %v567, %v645
    %v647 = vpop.f32.mrf.mxu0
    %648 = vdwg.mxu0
    %649 = vst.msk [vmem:[#allocation2] sm:$0xff] %vm285, %v641
    %650 = vst.msk [vmem:[#allocation2 + $0x8] sm:$0xff] %vm285, %v646
    %v651 = vld [vmem:[%s0] sm:$0xff]
    %v652 = vld [vmem:[%s0 + $0x8] sm:$0xff]
    %v653 = vsel %vm285, %v641, -inf
    %654 = vmax.xlane.f32.xlu0 %v653
    %v655 = vpop.xlane.xlu0 %654
    %v656 = vsel %vm285, %v646, -inf
    %657 = vmax.xlane.f32.xlu0 %v656
    %v658 = vpop.xlane.xlu0 %657
    %v659 = vsub.f32 %v641, %v655
    %v660 = vsub.f32 %v646, %v658
    %v661 = vmul.f32 %v659, 1.442695
    %v662 = vpow.pop %v661
    %v663 = vmul.f32 %v660, 1.442695
    %v664 = vpow.pop %v663
    %v665 = vsel %vm285, %v662, 0.0
    %666 = vadd.xlane.f32.xlu0 %v665
    %v667 = vpop.xlane.xlu0 %666
    %v668 = vsel %vm285, %v664, 0.0
    %669 = vadd.xlane.f32.xlu0 %v668
    %v670 = vpop.xlane.xlu0 %669
    %v671 = vlog2.pop %v667
    %v672 = vmul.f32 %v671, 0.6931472
    %v673 = vlog2.pop %v670
    %v674 = vmul.f32 %v673, 0.6931472
    %v675 = vadd.f32 %v672, %v655
    %v676 = vadd.f32 %v674, %v658
    %v677 = vsub.f32 %v641, %v675
    %v678 = vsub.f32 %v646, %v676
    %679 = vset.pattern.permute.xlu0 2
    %680 = vperm.xlu0 %679, %v651
    %v681 = vpop.permute.xlu0 %680
    %682 = vset.pattern.permute.xlu0 2
    %683 = vperm.xlu0 %682, %v652
    %v684 = vpop.permute.xlu0 %683
    %vm685 = vcmp.eq.s32.totalorder %v24, %v681
    %vm686 = vcmp.eq.s32.totalorder %v24, %v684
    %v687 = vsel %vm685, %v677, 0.0
    %v688 = vsel %vm686, %v678, 0.0
    %v689 = vsel %vm285, %v687, 0.0
    %690 = vadd.xlane.f32.xlu0 %v689
    %v691 = vpop.xlane.xlu0 %690
    %v692 = vsel %vm285, %v688, 0.0
    %693 = vadd.xlane.f32.xlu0 %v692
    %v694 = vpop.xlane.xlu0 %693
    %v695 = vsub.f32 0.0, %v691
    %v696 = vsub.f32 0.0, %v694
    %vm697 = vcmask 7168
    %v698 = vsel %vm697, %v695, 0.0
    %v699 = vsel %vm697, %v696, 0.0
    %v700 = vadd.f32 %v698, %v699
    %701 = vadd.xlane.f32.xlu0 %v700
    %v702 = vpop.xlane.xlu0 %701
    %v703 = vrot.slane %v702, 4
    %v704 = vadd.f32 %v702, %v703
    %v705 = vrot.slane %v704, 2
    %v706 = vadd.f32 %v704, %v705
    %v707 = vrot.slane %v706, 1
    %v708 = vadd.f32 %v706, %v707
    %s709 = vtos %v708
    %s710 = smul.f32 %s709, 0.0625
    %s711 = scalar_lea.smem [#allocation5], 0
    %712 = sst [smem:[%s711]] %s710
    // Predicated region
    $region18: #{fwd.1} parent=1 // pred_check
      _
    $region19: #{fwd.1} parent=1 // pred_check_branch
      %714 = sbr.rel (0) target = $region21
    $region20: #{fwd.1} parent=1 // pred_region
      %s716 = ssub.s32 256, 256
      %717 = vsyncadd [#allocation3], %s716
      %s718 = sshll.u32 [#allocation2], 4
      %s719 = int_to_ptr.vmem [resolvable:$true] %s718
      %724 = dma.vmem_to_hbm [thread:$0]  %s719, 256, %s4, [#allocation3], 128, 128, 8
    $region21: #{fwd.1} parent=1 // pred_fallthru
      _
    // Predicated region
    $region22: #{fwd.1} parent=1 // pred_check
      _
    $region23: #{fwd.1} parent=1 // pred_check_branch
      %726 = sbr.rel (0) target = $region25
    $region24: #{fwd.1} parent=1 // pred_region
      %s728 = ssub.s32 16, 16
      %729 = vsyncadd [#allocation4], %s728
      %732 = dma.smem_to_hbm [#allocation5], 16, %s5, [#allocation4]
    $region25: #{fwd.1} parent=1 // pred_fallthru
      _
    // Predicated region
    $region26: #{fwd.1} parent=1 // pred_check
      _
    $region27: #{fwd.1} parent=1 // pred_check_branch
      %734 = sbr.rel (0) target = $region29
    $region28: #{fwd.1} parent=1 // pred_region
      %735 = dma.done [#allocation3], 256
    $region29: #{fwd.1} parent=1 // pred_fallthru
      _
    // Predicated region
    $region30: #{fwd.1} parent=1 // pred_check
      _
    $region31: #{fwd.1} parent=1 // pred_check_branch
      %737 = sbr.rel (0) target = $region33
    $region32: #{fwd.1} parent=1 // pred_region
      %738 = dma.done [#allocation4], 16
    $region33: #{fwd.1} parent=1 // pred_fallthru
      _
    %739 = sfence
    %740 = vsyncpa [#allocation3], 1
    %741 = vsyncpa [#allocation4], 1

</llo_original>
